<compile_context>
chip_gen: v7x
topology: tpu7x:2x2x1
jax: 0.10.0
libtpu: 0.0.40
codegen_flags: <defaults>
</compile_context>

<pallas_src>
import jax
import jax.numpy as jnp
from jax.experimental import pallas as pl
from jax.experimental.pallas import tpu as pltpu


# --------------------------------------------------------------------------- kernel

def mlp_kernel(x_ref,
               w1_ref, b1_ref,
               w2_ref, b2_ref,
               w3_ref, b3_ref,
               w4_ref, b4_ref,
               o_ref):
    # x_ref: (22, TB) bf16 (batch on lanes); w_i: (out, in) bf16; b_i: (out, 1) f32.
    # Layer 1: (15,22) @ (22,TB) -> f32 acc, +bias, ReLU (f32), downcast for next MXU pass.
    h = jnp.dot(w1_ref[...], x_ref[...], preferred_element_type=jnp.float32) + b1_ref[...]
    h = jnp.maximum(h, 0.0).astype(jnp.bfloat16)
    # Layer 2: (8,15) @ (15,TB)
    h = jnp.dot(w2_ref[...], h, preferred_element_type=jnp.float32) + b2_ref[...]
    h = jnp.maximum(h, 0.0).astype(jnp.bfloat16)
    # Layer 3: (4,8) @ (8,TB)
    h = jnp.dot(w3_ref[...], h, preferred_element_type=jnp.float32) + b3_ref[...]
    h = jnp.maximum(h, 0.0).astype(jnp.bfloat16)
    # Layer 4: (2,4) @ (4,TB), no activation.
    o_ref[...] = (jnp.dot(w4_ref[...], h, preferred_element_type=jnp.float32)
                  + b4_ref[...]).astype(o_ref.dtype)


# --------------------------------------------------------------------------- tiling

def _round_up(n, m):
    return ((n + m - 1) // m) * m


def _choose_tiling(B, tile_b):
    """Pick a 128-aligned batch tile and step count.

    - tile_b caps the per-step tile (default 32K: fits comfortably in VMEM on all
      generations with the explicit vmem limit; v6e/v5e can sweep it higher).
    - For any batch big enough we keep >= 2 (even) steps so v7x's two TensorCores both
      get work under dimension_semantics=("parallel",).
    - The tile is derived from ceil(B / nsteps) so batch-padding waste stays small.
    """
    tile_b = max(128, _round_up(tile_b, 128))
    nsteps = pl.cdiv(B, tile_b)
    if nsteps == 1 and B > 128:
        nsteps = 2                       # give both v7x TCs work for medium batches
    if nsteps > 1 and nsteps % 2 == 1:
        nsteps += 1                      # even step count -> even split across 2 TCs
    tb = max(128, _round_up(pl.cdiv(B, nsteps), 128))
    nsteps = pl.cdiv(B, tb)              # recompute after 128-rounding
    return tb, nsteps


# --------------------------------------------------------------------------- pallas_call

def _pallas_mlp(xt, params, *, tb, out_dtype, vmem_limit_bytes):
    """xt: (22, Bp) bf16, Bp a multiple of tb (tb a multiple of 128). Returns (2, Bp)."""
    d_in, Bp = xt.shape
    assert d_in == 22 and Bp % tb == 0 and tb % 128 == 0
    grid = Bp // tb

    wdt = jnp.bfloat16
    args = (xt,
            params["w1"].astype(wdt), params["b1"],
            params["w2"].astype(wdt), params["b2"],
            params["w3"].astype(wdt), params["b3"],
            params["w4"].astype(wdt), params["b4"])

    def resident(shape):
        # Weights/biases: constant block index -> VMEM-resident, never re-DMA'd per step.
        return pl.BlockSpec(shape, lambda i: (0, 0))

    in_specs = [
        pl.BlockSpec((22, tb), lambda i: (0, i)),      # x^T tile, walks the batch axis
        resident((15, 22)), resident((15, 1)),
        resident((8, 15)),  resident((8, 1)),
        resident((4, 8)),   resident((4, 1)),
        resident((2, 4)),   resident((2, 1)),
    ]
    out_specs = pl.BlockSpec((2, tb), lambda i: (0, i))

    out_itemsize = jnp.dtype(out_dtype).itemsize
    flops = 2 * Bp * (22 * 15 + 15 * 8 + 8 * 4 + 4 * 2)
    bytes_accessed = (Bp * 22 * 2                                   # bf16 activations in
                      + (22 * 15 + 15 * 8 + 8 * 4 + 4 * 2) * 2      # bf16 weights
                      + (15 + 8 + 4 + 2) * 4                        # f32 biases
                      + Bp * 2 * out_itemsize)                      # output
    cost = pl.CostEstimate(flops=flops, transcendentals=0, bytes_accessed=bytes_accessed)

    return pl.pallas_call(
        mlp_kernel,
        out_shape=jax.ShapeDtypeStruct((2, Bp), out_dtype),
        grid=(grid,),
        in_specs=in_specs,
        out_specs=out_specs,
        compiler_params=pltpu.CompilerParams(
            dimension_semantics=("parallel",),
            vmem_limit_bytes=vmem_limit_bytes,
        ),
        cost_estimate=cost,
    )(*args)


# --------------------------------------------------------------------------- wrappers

def ann_forward_t(xt, params, *, tile_b=32768, out_dtype=jnp.bfloat16,
                  vmem_limit_bytes=48 * 1024 * 1024):
    """Zero-reshuffle fast path.

    xt: (22, B) bf16 with B a multiple of 128 (batch already on the lane axis).
    Returns (2, B) in `out_dtype` (bf16 by default to halve output HBM writes).
    """
    d_in, B = xt.shape
    assert d_in == 22 and B % 128 == 0, "fast path expects (22, B) with B % 128 == 0"
    tb, nsteps = _choose_tiling(B, tile_b)
    # B is already 128-aligned; _choose_tiling only returns tiles dividing a 128-aligned Bp.
    Bp = tb * nsteps
    if Bp != B:
        xt = jnp.pad(xt, ((0, 0), (0, Bp - B)))
    out = _pallas_mlp(xt, params, tb=tb, out_dtype=out_dtype,
                      vmem_limit_bytes=vmem_limit_bytes)
    return out[:, :B]


def ann_forward(x, params, *, tile_b=32768, out_dtype=jnp.float32,
                vmem_limit_bytes=48 * 1024 * 1024):
    """Module-faithful path: x (B, 22) f32 -> (B, 2) `out_dtype` (f32 by default).

    Note: the cast/transpose/pad here and the final transpose are wrapper-side HBM
    passes; producers that can supply (22, B) bf16 should call `ann_forward_t` instead.
    """
    B = x.shape[0]
    tb, nsteps = _choose_tiling(B, tile_b)
    Bp = tb * nsteps

    # Single fused expression: cast + transpose (+ pad) so XLA emits one copy fusion.
    xt = x.T.astype(jnp.bfloat16)
    if Bp != B:
        xt = jnp.pad(xt, ((0, 0), (0, Bp - B)))        # padded cols computed, sliced off

    out_t = _pallas_mlp(xt, params, tb=tb, out_dtype=out_dtype,
                        vmem_limit_bytes=vmem_limit_bytes)
    return out_t[:, :B].T                              # back to (B, 2)


# --------------------------------------------------------------------------- reference

def init_params(key):
    """Deterministic PyTorch-style init; weights stored (out, in), biases (out, 1)."""
    dims = [(22, 15), (15, 8), (8, 4), (4, 2)]
    params = {}
    for i, (fan_in, fan_out) in enumerate(dims, start=1):
        key, kw, kb = jax.random.split(key, 3)
        bound = 1.0 / (fan_in ** 0.5)
        params[f"w{i}"] = jax.random.uniform(kw, (fan_out, fan_in), jnp.float32,
                                             minval=-bound, maxval=bound)
        params[f"b{i}"] = jax.random.uniform(kb, (fan_out, 1), jnp.float32,
                                             minval=-bound, maxval=bound)
    return params


def reference_forward(x, params):
    """Pure-JAX f32 reference matching the PyTorch module semantics."""
    h = jnp.maximum(x @ params["w1"].T + params["b1"].T, 0.0)
    h = jnp.maximum(h @ params["w2"].T + params["b2"].T, 0.0)
    h = jnp.maximum(h @ params["w3"].T + params["b3"].T, 0.0)
    return h @ params["w4"].T + params["b4"].T


# --------------------------------------------------------------------------- test

if __name__ == "__main__":
    key = jax.random.PRNGKey(0)
    kx, kx2, kp = jax.random.split(key, 3)
    params = init_params(kp)

    # Small batch: single 128-lane tile (fully unmasked stores).
    B = 8
    x = jax.random.normal(kx, (B, 22), jnp.float32)
    out = jax.block_until_ready(ann_forward(x, params))
    ref = reference_forward(x, params)
    assert out.shape == (B, 2)
    # bf16 activations/weights vs f32 reference -> relaxed tolerance.
    assert jnp.allclose(out, ref, atol=3e-2, rtol=3e-2), "small-batch mismatch vs f32 reference"

    # Medium batch: exercises the padded, 2-step gridded path (even grid for v7x TC split).
    B2 = 1000
    x2 = jax.random.normal(kx2, (B2, 22), jnp.float32)
    out2 = jax.block_until_ready(ann_forward(x2, params))
    ref2 = reference_forward(x2, params)
    assert out2.shape == (B2, 2)
    assert jnp.allclose(out2, ref2, atol=3e-2, rtol=3e-2), "tiled-batch mismatch vs f32 reference"

    # Transposed fast path (no wrapper reshuffle): (22, B) bf16 in, (2, B) bf16 out.
    B3 = 256
    xt3 = x2[:B3].T.astype(jnp.bfloat16)
    out3 = jax.block_until_ready(ann_forward_t(xt3, params))
    assert out3.shape == (2, B3)
    assert jnp.allclose(out3.astype(jnp.float32).T, ref2[:B3], atol=3e-2, rtol=3e-2), \
        "transposed-path mismatch vs f32 reference"

    print("KERNEL_OK")
</pallas_src>

<mosaic_0001>
module attributes {stable_mosaic.version = 11 : i64} {
  func.func @mlp_kernel(%arg0: i32, %arg1: memref<22x128xbf16, #tpu.memory_space<vmem>>, %arg2: memref<15x22xbf16, #tpu.memory_space<vmem>>, %arg3: memref<15x1xf32, #tpu.memory_space<vmem>>, %arg4: memref<8x15xbf16, #tpu.memory_space<vmem>>, %arg5: memref<8x1xf32, #tpu.memory_space<vmem>>, %arg6: memref<4x8xbf16, #tpu.memory_space<vmem>>, %arg7: memref<4x1xf32, #tpu.memory_space<vmem>>, %arg8: memref<2x4xbf16, #tpu.memory_space<vmem>>, %arg9: memref<2x1xf32, #tpu.memory_space<vmem>>, %arg10: memref<2x128xf32, #tpu.memory_space<vmem>>) attributes {dimension_semantics = [#tpu.dimension_semantics<parallel>], iteration_bounds = array<i64: 1>, scalar_prefetch = 0 : i64, scratch_operands = 0 : i64, tpu.core_type = #tpu.core_type<tc>, window_params = [{transform_indices = @transform_0, window_bounds = array<i64: 22, 128>}, {pipeline_mode = #tpu.pipeline_mode<synchronous>, transform_indices = @transform_1, window_bounds = array<i64: 15, 22>}, {pipeline_mode = #tpu.pipeline_mode<synchronous>, transform_indices = @transform_2, window_bounds = array<i64: 15, 1>}, {pipeline_mode = #tpu.pipeline_mode<synchronous>, transform_indices = @transform_3, window_bounds = array<i64: 8, 15>}, {pipeline_mode = #tpu.pipeline_mode<synchronous>, transform_indices = @transform_4, window_bounds = array<i64: 8, 1>}, {pipeline_mode = #tpu.pipeline_mode<synchronous>, transform_indices = @transform_5, window_bounds = array<i64: 4, 8>}, {pipeline_mode = #tpu.pipeline_mode<synchronous>, transform_indices = @transform_6, window_bounds = array<i64: 4, 1>}, {pipeline_mode = #tpu.pipeline_mode<synchronous>, transform_indices = @transform_7, window_bounds = array<i64: 2, 4>}, {pipeline_mode = #tpu.pipeline_mode<synchronous>, transform_indices = @transform_8, window_bounds = array<i64: 2, 1>}, {transform_indices = @transform_9, window_bounds = array<i64: 2, 128>}]} {
    %c0 = arith.constant 0 : index
    %c0_0 = arith.constant 0 : index
    %0 = vector.load %arg2[%c0, %c0_0] : memref<15x22xbf16, #tpu.memory_space<vmem>>, vector<15x22xbf16>
    %c0_1 = arith.constant 0 : index
    %c0_2 = arith.constant 0 : index
    %1 = vector.load %arg1[%c0_1, %c0_2] : memref<22x128xbf16, #tpu.memory_space<vmem>>, vector<22x128xbf16>
    %cst = arith.constant dense<0.000000e+00> : vector<15x128xf32>
    %2 = tpu.matmul %0, %1, %cst {dimension_numbers = #tpu.dot_dimension_numbers<[1], [0], [0], [1], [0, 0, 1, 1], [], []>} : vector<15x22xbf16>, vector<22x128xbf16>, vector<15x128xf32> -> vector<15x128xf32>
    %c0_3 = arith.constant 0 : index
    %c0_4 = arith.constant 0 : index
    %3 = vector.load %arg3[%c0_3, %c0_4] : memref<15x1xf32, #tpu.memory_space<vmem>>, vector<15x1xf32>
    %4 = vector.broadcast %3 : vector<15x1xf32> to vector<15x128xf32>
    %5 = arith.addf %2, %4 : vector<15x128xf32>
    %cst_5 = arith.constant 0.000000e+00 : f32
    %6 = vector.broadcast %cst_5 : f32 to vector<15x128xf32>
    %7 = arith.maximumf %5, %6 : vector<15x128xf32>
    %8 = arith.truncf %7 : vector<15x128xf32> to vector<15x128xbf16>
    %c0_6 = arith.constant 0 : index
    %c0_7 = arith.constant 0 : index
    %9 = vector.load %arg4[%c0_6, %c0_7] : memref<8x15xbf16, #tpu.memory_space<vmem>>, vector<8x15xbf16>
    %cst_8 = arith.constant dense<0.000000e+00> : vector<8x128xf32>
    %10 = tpu.matmul %9, %8, %cst_8 {dimension_numbers = #tpu.dot_dimension_numbers<[1], [0], [0], [1], [0, 0, 1, 1], [], []>} : vector<8x15xbf16>, vector<15x128xbf16>, vector<8x128xf32> -> vector<8x128xf32>
    %c0_9 = arith.constant 0 : index
    %c0_10 = arith.constant 0 : index
    %11 = vector.load %arg5[%c0_9, %c0_10] : memref<8x1xf32, #tpu.memory_space<vmem>>, vector<8x1xf32>
    %12 = vector.broadcast %11 : vector<8x1xf32> to vector<8x128xf32>
    %13 = arith.addf %10, %12 : vector<8x128xf32>
    %cst_11 = arith.constant 0.000000e+00 : f32
    %14 = vector.broadcast %cst_11 : f32 to vector<8x128xf32>
    %15 = arith.maximumf %13, %14 : vector<8x128xf32>
    %16 = arith.truncf %15 : vector<8x128xf32> to vector<8x128xbf16>
    %c0_12 = arith.constant 0 : index
    %c0_13 = arith.constant 0 : index
    %17 = vector.load %arg6[%c0_12, %c0_13] : memref<4x8xbf16, #tpu.memory_space<vmem>>, vector<4x8xbf16>
    %cst_14 = arith.constant dense<0.000000e+00> : vector<4x128xf32>
    %18 = tpu.matmul %17, %16, %cst_14 {dimension_numbers = #tpu.dot_dimension_numbers<[1], [0], [0], [1], [0, 0, 1, 1], [], []>} : vector<4x8xbf16>, vector<8x128xbf16>, vector<4x128xf32> -> vector<4x128xf32>
    %c0_15 = arith.constant 0 : index
    %c0_16 = arith.constant 0 : index
    %19 = vector.load %arg7[%c0_15, %c0_16] : memref<4x1xf32, #tpu.memory_space<vmem>>, vector<4x1xf32>
    %20 = vector.broadcast %19 : vector<4x1xf32> to vector<4x128xf32>
    %21 = arith.addf %18, %20 : vector<4x128xf32>
    %cst_17 = arith.constant 0.000000e+00 : f32
    %22 = vector.broadcast %cst_17 : f32 to vector<4x128xf32>
    %23 = arith.maximumf %21, %22 : vector<4x128xf32>
    %24 = arith.truncf %23 : vector<4x128xf32> to vector<4x128xbf16>
    %c0_18 = arith.constant 0 : index
    %c0_19 = arith.constant 0 : index
    %25 = vector.load %arg8[%c0_18, %c0_19] : memref<2x4xbf16, #tpu.memory_space<vmem>>, vector<2x4xbf16>
    %cst_20 = arith.constant dense<0.000000e+00> : vector<2x128xf32>
    %26 = tpu.matmul %25, %24, %cst_20 {dimension_numbers = #tpu.dot_dimension_numbers<[1], [0], [0], [1], [0, 0, 1, 1], [], []>} : vector<2x4xbf16>, vector<4x128xbf16>, vector<2x128xf32> -> vector<2x128xf32>
    %c0_21 = arith.constant 0 : index
    %c0_22 = arith.constant 0 : index
    %27 = vector.load %arg9[%c0_21, %c0_22] : memref<2x1xf32, #tpu.memory_space<vmem>>, vector<2x1xf32>
    %28 = vector.broadcast %27 : vector<2x1xf32> to vector<2x128xf32>
    %29 = arith.addf %26, %28 : vector<2x128xf32>
    %c0_23 = arith.constant 0 : index
    %c0_24 = arith.constant 0 : index
    %30 = vector.load %arg10[%c0_23, %c0_24] : memref<2x128xf32, #tpu.memory_space<vmem>>, vector<2x128xf32>
    tpu.vector_store %arg10[%c0_23, %c0_24], %29 {strides = array<i32>} : memref<2x128xf32, #tpu.memory_space<vmem>>, vector<2x128xf32>,
    return
  }
  func.func @transform_0(%arg0: i32) -> (i32, i32) {
    %c0_i32 = arith.constant 0 : i32
    %c0_i32_0 = arith.constant 0 : i32
    return %c0_i32, %arg0 : i32, i32
  }
  func.func @transform_1(%arg0: i32) -> (i32, i32) {
    %c0_i32 = arith.constant 0 : i32
    %c0_i32_0 = arith.constant 0 : i32
    %c0_i32_1 = arith.constant 0 : i32
    return %c0_i32, %c0_i32_0 : i32, i32
  }
  func.func @transform_2(%arg0: i32) -> (i32, i32) {
    %c0_i32 = arith.constant 0 : i32
    %c0_i32_0 = arith.constant 0 : i32
    %c0_i32_1 = arith.constant 0 : i32
    return %c0_i32, %c0_i32_0 : i32, i32
  }
  func.func @transform_3(%arg0: i32) -> (i32, i32) {
    %c0_i32 = arith.constant 0 : i32
    %c0_i32_0 = arith.constant 0 : i32
    %c0_i32_1 = arith.constant 0 : i32
    return %c0_i32, %c0_i32_0 : i32, i32
  }
  func.func @transform_4(%arg0: i32) -> (i32, i32) {
    %c0_i32 = arith.constant 0 : i32
    %c0_i32_0 = arith.constant 0 : i32
    %c0_i32_1 = arith.constant 0 : i32
    return %c0_i32, %c0_i32_0 : i32, i32
  }
  func.func @transform_5(%arg0: i32) -> (i32, i32) {
    %c0_i32 = arith.constant 0 : i32
    %c0_i32_0 = arith.constant 0 : i32
    %c0_i32_1 = arith.constant 0 : i32
    return %c0_i32, %c0_i32_0 : i32, i32
  }
  func.func @transform_6(%arg0: i32) -> (i32, i32) {
    %c0_i32 = arith.constant 0 : i32
    %c0_i32_0 = arith.constant 0 : i32
    %c0_i32_1 = arith.constant 0 : i32
    return %c0_i32, %c0_i32_0 : i32, i32
  }
  func.func @transform_7(%arg0: i32) -> (i32, i32) {
    %c0_i32 = arith.constant 0 : i32
    %c0_i32_0 = arith.constant 0 : i32
    %c0_i32_1 = arith.constant 0 : i32
    return %c0_i32, %c0_i32_0 : i32, i32
  }
  func.func @transform_8(%arg0: i32) -> (i32, i32) {
    %c0_i32 = arith.constant 0 : i32
    %c0_i32_0 = arith.constant 0 : i32
    %c0_i32_1 = arith.constant 0 : i32
    return %c0_i32, %c0_i32_0 : i32, i32
  }
  func.func @transform_9(%arg0: i32) -> (i32, i32) {
    %c0_i32 = arith.constant 0 : i32
    %c0_i32_0 = arith.constant 0 : i32
    return %c0_i32, %arg0 : i32, i32
  }
}

</mosaic_0001>

<llo_original>
// kernel: tpu_custom_call.1
$region0: #{tpu_custom_call.1}
  #allocation0 [shape = 'u32[]', space=smem, size = 0x4, offset = 0x4, fixed_abs, tag = 'smem constant byte address 0x4 - core index']
  #allocation1 [shape = 'u32[144,128]{1,0:T(1,128)}', space=vmem, size = 0x12000, scoped, tag = 'internal scratch']
  %s0 = inlined_call_operand.vmem [shape: bf16[22,128], index: 0, kind: input, shape index: {}]
  %s1 = inlined_call_operand.vmem [shape: bf16[15,22], index: 1, kind: input, shape index: {}]
  %s2 = inlined_call_operand.vmem [shape: f32[15,1], index: 2, kind: input, shape index: {}]
  %s3 = inlined_call_operand.vmem [shape: bf16[8,15], index: 3, kind: input, shape index: {}]
  %s4 = inlined_call_operand.vmem [shape: f32[8,1], index: 4, kind: input, shape index: {}]
  %s5 = inlined_call_operand.vmem [shape: bf16[4,8], index: 5, kind: input, shape index: {}]
  %s6 = inlined_call_operand.vmem [shape: f32[4,1], index: 6, kind: input, shape index: {}]
  %s7 = inlined_call_operand.vmem [shape: bf16[2,4], index: 7, kind: input, shape index: {}]
  %s8 = inlined_call_operand.vmem [shape: f32[2,1], index: 8, kind: input, shape index: {}]
  %s9 = inlined_call_operand.hbm [shape: f32[2,128], index: 9, kind: output, shape index: {}]
  %s10 = sld [smem:[#allocation0]]
  $region46: #{tpu_custom_call.1} parent=0
    _
  %s12 = ssub.s32 1, %s10
  %s13 = scalar_select 0, %s12, %s10
  $region1: #{tpu_custom_call.1} parent=0
    #allocation2 [shape = 'u8[1024]{0}', space=vmem, size = 0x400, scoped, tag = 'output window, operand 0, single buffered']
    #allocation3 [shape = 's32[1]{0}', space=sflag, size = 0x4, scoped, tag = 'scoped memory for tpu_custom_call.1']
    %14 = vsyncpa [#allocation3], 0
    // Predicated region
    $region2: #{tpu_custom_call.1} parent=1 // pred_check
      _
    $region3: #{tpu_custom_call.1} parent=1 // pred_check_branch
      %16 = sbr.rel (0) target = $region5
    $region4: #{tpu_custom_call.1} parent=1 // pred_region
      _
    $region5: #{tpu_custom_call.1} parent=1 // pred_fallthru
      _
    // Predicated region
    $region6: #{tpu_custom_call.1} parent=1 // pred_check
      _
    $region7: #{tpu_custom_call.1} parent=1 // pred_check_branch
      %18 = sbr.rel (0) target = $region9
    $region8: #{tpu_custom_call.1} parent=1 // pred_region
      _
    $region9: #{tpu_custom_call.1} parent=1 // pred_fallthru
      _
    // Predicated region
    $region10: #{tpu_custom_call.1} parent=1 // pred_check
      _
    $region11: #{tpu_custom_call.1} parent=1 // pred_check_branch
      %20 = sbr.rel (0) target = $region13
    $region12: #{tpu_custom_call.1} parent=1 // pred_region
      _
    $region13: #{tpu_custom_call.1} parent=1 // pred_fallthru
      _
    // Predicated region
    $region14: #{tpu_custom_call.1} parent=1 // pred_check
      _
    $region15: #{tpu_custom_call.1} parent=1 // pred_check_branch
      %22 = sbr.rel (0) target = $region17
    $region16: #{tpu_custom_call.1} parent=1 // pred_region
      _
    $region17: #{tpu_custom_call.1} parent=1 // pred_fallthru
      _
    // Predicated region
    $region18: #{tpu_custom_call.1} parent=1 // pred_check
      _
    $region19: #{tpu_custom_call.1} parent=1 // pred_check_branch
      %24 = sbr.rel (0) target = $region21
    $region20: #{tpu_custom_call.1} parent=1 // pred_region
      _
    $region21: #{tpu_custom_call.1} parent=1 // pred_fallthru
      _
    // Predicated region
    $region22: #{tpu_custom_call.1} parent=1 // pred_check
      _
    $region23: #{tpu_custom_call.1} parent=1 // pred_check_branch
      %26 = sbr.rel (0) target = $region25
    $region24: #{tpu_custom_call.1} parent=1 // pred_region
      _
    $region25: #{tpu_custom_call.1} parent=1 // pred_fallthru
      _
    // Predicated region
    $region26: #{tpu_custom_call.1} parent=1 // pred_check
      _
    $region27: #{tpu_custom_call.1} parent=1 // pred_check_branch
      %28 = sbr.rel (0) target = $region29
    $region28: #{tpu_custom_call.1} parent=1 // pred_region
      _
    $region29: #{tpu_custom_call.1} parent=1 // pred_fallthru
      _
    // Predicated region
    $region30: #{tpu_custom_call.1} parent=1 // pred_check
      _
    $region31: #{tpu_custom_call.1} parent=1 // pred_check_branch
      %30 = sbr.rel (0) target = $region33
    $region32: #{tpu_custom_call.1} parent=1 // pred_region
      _
    $region33: #{tpu_custom_call.1} parent=1 // pred_fallthru
      _
    // Predicated region
    $region34: #{tpu_custom_call.1} parent=1 // pred_check
      _
    $region35: #{tpu_custom_call.1} parent=1 // pred_check_branch
      %32 = sbr.rel (0) target = $region37
    $region36: #{tpu_custom_call.1} parent=1 // pred_region
      _
    $region37: #{tpu_custom_call.1} parent=1 // pred_fallthru
      _
    %v34 = vld [vmem:[%s1] sm:$0xf]
    %v35 = vld [vmem:[%s1 + $0x4] sm:$0xf]
    %v36 = vld [vmem:[%s0] sm:$0xf]
    %v37 = vld [vmem:[%s0 + $0x4] sm:$0xf]
    %v38 = vld [vmem:[%s0 + $0x8] sm:$0x7]
    %v39 = vld [vmem:[%s2] sm:$0xff]
    %v40 = vld [vmem:[%s2 + $0x8] sm:$0x7f]
    %42 = vset.pattern.permute.xlu0 0
    %43 = vperm.xlu0 %42, %v39
    %v44 = vpop.permute.xlu0 %43
    %47 = vset.pattern.permute.xlu0 0
    %48 = vperm.xlu0 %47, %v40
    %v49 = vpop.permute.xlu0 %48
    %v53 = vunpack.c.l.b16 %v34
    %v54 = vunpack.c.l.b16 %v35
    %v55 = vpack.c.b16 %v54, %v53
    %v59 = vunpack.c.l.b16 %v36
    %v60 = vunpack.c.l.b16 %v37
    %v61 = vunpack.c.l.b16 %v38
    %v62 = vpack.c.b16 %v60, %v59
    %v63 = vpack.c.b16 %v61, %v61
    %vm65 = vcmask 179200
    %v67 = vsel %vm65, %v55, 0
    %vm69 = vcmask 1042432
    %v71 = vsel %vm69, %v63, 0
    %73 = vmatprep.subr.bf16.mxu0 0
    %74 = vmatpush1.bf16.msra.mxu0 %v62
    %75 = vmatprep.subr.bf16.mxu0 0
    %76 = vmatpush1.bf16.msra.mxu0 %v71
    %77 = vmatprep.subr.bf16.mxu0 0
    %78 = vmatpush1.bf16.msra.mxu0 0
    %79 = vmatprep.subr.bf16.mxu0 0
    %80 = vmatpush1.bf16.msra.mxu0 0
    %81 = vmatprep.subr.bf16.mxu0 0
    %82 = vmatpush1.bf16.msra.mxu0 0
    %83 = vmatprep.subr.bf16.mxu0 0
    %84 = vmatpush1.bf16.msra.mxu0 0
    %85 = vmatprep.subr.bf16.mxu0 0
    %86 = vmatpush1.bf16.msra.mxu0 0
    %87 = vmatprep.subr.bf16.mxu0 0
    %88 = vmatpush1.bf16.msra.mxu0 0
    %89 = vmatprep.subr.bf16.mxu0 0
    %90 = vmatpush1.bf16.msra.mxu0 0
    %91 = vmatprep.subr.bf16.mxu0 0
    %92 = vmatpush1.bf16.msra.mxu0 0
    %93 = vmatprep.subr.bf16.mxu0 0
    %94 = vmatpush1.bf16.msra.mxu0 0
    %95 = vmatprep.subr.bf16.mxu0 0
    %96 = vmatpush1.bf16.msra.mxu0 0
    %97 = vmatprep.subr.bf16.mxu0 0
    %98 = vmatpush1.bf16.msra.mxu0 0
    %99 = vmatprep.subr.bf16.mxu0 0
    %100 = vmatpush1.bf16.msra.mxu0 0
    %101 = vmatprep.subr.bf16.mxu0 0
    %102 = vmatpush1.bf16.msra.mxu0 0
    %103 = vmatprep.subr.bf16.mxu0 0
    %104 = vmatpush1.bf16.msra.mxu0 0
    %105 = vmatprep.mubr.bf16.mxu0 0
    %106 = vmatmul.mubr.bf16.gmra.mrb[0].mxu0 %v67
    %v107 = vpop.f32.mrb[0].mxu0
    %v108 = vadd.f32 %v44, %v107
    %v109 = vpop.f32.mrb[0].mxu0
    %v110 = vpop.f32.mrb[0].mxu0
    %v111 = vadd.f32 %v49, %v110
    %v112 = vpop.f32.mrb[0].mxu0
    %113 = vdwg.mxu0
    %v114 = vmax.f32 %v108, 0.0
    %v115 = vmax.f32 %v111, 0.0
    %v116 = vpack.c.bf16 %v115, %v114
    %v117 = vld [vmem:[%s3] sm:$0xf]
    %v118 = vld [vmem:[%s4] sm:$0xff]
    %120 = vset.pattern.permute.xlu0 0
    %121 = vperm.xlu0 %120, %v118
    %v122 = vpop.permute.xlu0 %121
    %vm124 = vcmask 121856
    %v126 = vsel %vm124, %v117, 0
    %vm128 = vcmask 1046528
    %vm129 = vcmask 1047552
    %v130 = vsel %vm128, 4294967295, 65535
    %v131 = vsel %vm129, %v130, 0
    %v133 = vand.u32 %v116, %v131
    %135 = vmatprep.subr.bf16.mxu0 0
    %136 = vmatpush1.bf16.msra.mxu0 %v133
    %137 = vmatprep.subr.bf16.mxu0 0
    %138 = vmatpush1.bf16.msra.mxu0 0
    %139 = vmatprep.subr.bf16.mxu0 0
    %140 = vmatpush1.bf16.msra.mxu0 0
    %141 = vmatprep.subr.bf16.mxu0 0
    %142 = vmatpush1.bf16.msra.mxu0 0
    %143 = vmatprep.subr.bf16.mxu0 0
    %144 = vmatpush1.bf16.msra.mxu0 0
    %145 = vmatprep.subr.bf16.mxu0 0
    %146 = vmatpush1.bf16.msra.mxu0 0
    %147 = vmatprep.subr.bf16.mxu0 0
    %148 = vmatpush1.bf16.msra.mxu0 0
    %149 = vmatprep.subr.bf16.mxu0 0
    %150 = vmatpush1.bf16.msra.mxu0 0
    %151 = vmatprep.subr.bf16.mxu0 0
    %152 = vmatpush1.bf16.msra.mxu0 0
    %153 = vmatprep.subr.bf16.mxu0 0
    %154 = vmatpush1.bf16.msra.mxu0 0
    %155 = vmatprep.subr.bf16.mxu0 0
    %156 = vmatpush1.bf16.msra.mxu0 0
    %157 = vmatprep.subr.bf16.mxu0 0
    %158 = vmatpush1.bf16.msra.mxu0 0
    %159 = vmatprep.subr.bf16.mxu0 0
    %160 = vmatpush1.bf16.msra.mxu0 0
    %161 = vmatprep.subr.bf16.mxu0 0
    %162 = vmatpush1.bf16.msra.mxu0 0
    %163 = vmatprep.subr.bf16.mxu0 0
    %164 = vmatpush1.bf16.msra.mxu0 0
    %165 = vmatprep.subr.bf16.mxu0 0
    %166 = vmatpush1.bf16.msra.mxu0 0
    %167 = vmatprep.mubr.bf16.mxu0 0
    %168 = vmatmul.mubr.bf16.gmra.mrb[0].mxu0 %v126
    %v169 = vpop.f32.mrb[0].mxu0
    %v170 = vadd.f32 %v122, %v169
    %v171 = vpop.f32.mrb[0].mxu0
    %v172 = vpop.f32.mrb[0].mxu0
    %v173 = vpop.f32.mrb[0].mxu0
    %174 = vdwg.mxu0
    %v175 = vmax.f32 %v170, 0.0
    %v176 = vpack.c.bf16 %v175, %v175
    %v177 = vld [vmem:[%s5] sm:$0x3]
    %v178 = vld [vmem:[%s6] sm:$0xf]
    %180 = vset.pattern.permute.xlu0 0
    %181 = vperm.xlu0 %180, %v178
    %v182 = vpop.permute.xlu0 %181
    %vm184 = vcmask 64512
    %v186 = vsel %vm184, %v177, 0
    %vm188 = vcmask 1043456
    %v190 = vsel %vm188, %v176, 0
    %192 = vmatprep.subr.bf16.mxu0 0
    %193 = vmatpush1.bf16.msra.mxu0 %v190
    %194 = vmatprep.subr.bf16.mxu0 0
    %195 = vmatpush1.bf16.msra.mxu0 0
    %196 = vmatprep.subr.bf16.mxu0 0
    %197 = vmatpush1.bf16.msra.mxu0 0
    %198 = vmatprep.subr.bf16.mxu0 0
    %199 = vmatpush1.bf16.msra.mxu0 0
    %200 = vmatprep.subr.bf16.mxu0 0
    %201 = vmatpush1.bf16.msra.mxu0 0
    %202 = vmatprep.subr.bf16.mxu0 0
    %203 = vmatpush1.bf16.msra.mxu0 0
    %204 = vmatprep.subr.bf16.mxu0 0
    %205 = vmatpush1.bf16.msra.mxu0 0
    %206 = vmatprep.subr.bf16.mxu0 0
    %207 = vmatpush1.bf16.msra.mxu0 0
    %208 = vmatprep.subr.bf16.mxu0 0
    %209 = vmatpush1.bf16.msra.mxu0 0
    %210 = vmatprep.subr.bf16.mxu0 0
    %211 = vmatpush1.bf16.msra.mxu0 0
    %212 = vmatprep.subr.bf16.mxu0 0
    %213 = vmatpush1.bf16.msra.mxu0 0
    %214 = vmatprep.subr.bf16.mxu0 0
    %215 = vmatpush1.bf16.msra.mxu0 0
    %216 = vmatprep.subr.bf16.mxu0 0
    %217 = vmatpush1.bf16.msra.mxu0 0
    %218 = vmatprep.subr.bf16.mxu0 0
    %219 = vmatpush1.bf16.msra.mxu0 0
    %220 = vmatprep.subr.bf16.mxu0 0
    %221 = vmatpush1.bf16.msra.mxu0 0
    %222 = vmatprep.subr.bf16.mxu0 0
    %223 = vmatpush1.bf16.msra.mxu0 0
    %224 = vmatprep.mubr.bf16.mxu0 0
    %225 = vmatmul.mubr.bf16.gmra.mrb[0].mxu0 %v186
    %v226 = vpop.f32.mrb[0].mxu0
    %v227 = vadd.f32 %v182, %v226
    %v228 = vpop.f32.mrb[0].mxu0
    %v229 = vpop.f32.mrb[0].mxu0
    %v230 = vpop.f32.mrb[0].mxu0
    %231 = vdwg.mxu0
    %v232 = vmax.f32 %v227, 0.0
    %v233 = vpack.c.bf16 %v232, %v232
    %v234 = vld [vmem:[%s7] sm:$0x1]
    %v235 = vld [vmem:[%s8] sm:$0x3]
    %237 = vset.pattern.permute.xlu0 0
    %238 = vperm.xlu0 %237, %v235
    %v239 = vpop.permute.xlu0 %238
    %vm241 = vcmask 31744
    %v243 = vsel %vm241, %v234, 0
    %vm245 = vcmask 1041408
    %v247 = vsel %vm245, %v233, 0
    %249 = vmatprep.subr.bf16.mxu0 0
    %250 = vmatpush1.bf16.msra.mxu0 %v247
    %251 = vmatprep.subr.bf16.mxu0 0
    %252 = vmatpush1.bf16.msra.mxu0 0
    %253 = vmatprep.subr.bf16.mxu0 0
    %254 = vmatpush1.bf16.msra.mxu0 0
    %255 = vmatprep.subr.bf16.mxu0 0
    %256 = vmatpush1.bf16.msra.mxu0 0
    %257 = vmatprep.subr.bf16.mxu0 0
    %258 = vmatpush1.bf16.msra.mxu0 0
    %259 = vmatprep.subr.bf16.mxu0 0
    %260 = vmatpush1.bf16.msra.mxu0 0
    %261 = vmatprep.subr.bf16.mxu0 0
    %262 = vmatpush1.bf16.msra.mxu0 0
    %263 = vmatprep.subr.bf16.mxu0 0
    %264 = vmatpush1.bf16.msra.mxu0 0
    %265 = vmatprep.subr.bf16.mxu0 0
    %266 = vmatpush1.bf16.msra.mxu0 0
    %267 = vmatprep.subr.bf16.mxu0 0
    %268 = vmatpush1.bf16.msra.mxu0 0
    %269 = vmatprep.subr.bf16.mxu0 0
    %270 = vmatpush1.bf16.msra.mxu0 0
    %271 = vmatprep.subr.bf16.mxu0 0
    %272 = vmatpush1.bf16.msra.mxu0 0
    %273 = vmatprep.subr.bf16.mxu0 0
    %274 = vmatpush1.bf16.msra.mxu0 0
    %275 = vmatprep.subr.bf16.mxu0 0
    %276 = vmatpush1.bf16.msra.mxu0 0
    %277 = vmatprep.subr.bf16.mxu0 0
    %278 = vmatpush1.bf16.msra.mxu0 0
    %279 = vmatprep.subr.bf16.mxu0 0
    %280 = vmatpush1.bf16.msra.mxu0 0
    %281 = vmatprep.mubr.bf16.mxu0 0
    %282 = vmatmul.mubr.bf16.gmra.mrb[0].mxu0 %v243
    %v283 = vpop.f32.mrb[0].mxu0
    %v284 = vadd.f32 %v239, %v283
    %v285 = vpop.f32.mrb[0].mxu0
    %v286 = vpop.f32.mrb[0].mxu0
    %v287 = vpop.f32.mrb[0].mxu0
    %288 = vdwg.mxu0
    %289 = vst [vmem:[#allocation2] sm:$0x3] %v284
    // Predicated region
    $region38: #{tpu_custom_call.1} parent=1 // pred_check
      _
    $region39: #{tpu_custom_call.1} parent=1 // pred_check_branch
      %291 = sbr.rel (0) target = $region41
    $region40: #{tpu_custom_call.1} parent=1 // pred_region
      %s293 = ssub.s32 32, 32
      %294 = vsyncadd [#allocation3], %s293
      %s296 = sshll.u32 [#allocation2], 4
      %s297 = int_to_ptr.vmem [resolvable:$true] %s296
      %299 = dma.vmem_to_hbm [thread:$0]  %s297, 32, %s9, [#allocation3]
    $region41: #{tpu_custom_call.1} parent=1 // pred_fallthru
      _
    // Predicated region
    $region42: #{tpu_custom_call.1} parent=1 // pred_check
      _
    $region43: #{tpu_custom_call.1} parent=1 // pred_check_branch
      %301 = sbr.rel (0) target = $region45
    $region44: #{tpu_custom_call.1} parent=1 // pred_region
      %302 = dma.done [#allocation3], 32
    $region45: #{tpu_custom_call.1} parent=1 // pred_fallthru
      _
    %303 = vsyncpa [#allocation3], 1

</llo_original>
